<compile_context>
chip_gen: v7x
topology: tpu7x:2x2x1
jax: 0.10.0
libtpu: 0.0.40
codegen_flags: <defaults>
</compile_context>

<pallas_src>
import functools

import jax
import jax.numpy as jnp
from jax import lax
from jax.experimental import pallas as pl
from jax.experimental.pallas import tpu as pltpu


def _round_up(x, m):
    return ((x + m - 1) // m) * m


def _depth_marker_loss_kernel(pred_ref, tgt_ref, out_ref, *, actual_l):
    """One batch tile -> three partial sums written to a lane-dense (8,128) tile.

    lane 0: sum((p - t)^2)              [over the whole padded tile; pads are 0]
    lane 1: sum(relu(p[:, j] - p[:, j+1])) for j < L-1
    lane 2: sum over rows of sum((p - row_mean)^2) over the L valid columns
    """
    p = pred_ref[...].astype(jnp.float32)   # (bm, Lp)
    t = tgt_ref[...].astype(jnp.float32)    # (bm, Lp)
    bm, lp = p.shape

    lane = lax.broadcasted_iota(jnp.int32, (bm, lp), 1)
    col_valid = lane < actual_l

    # --- MSE partial. Wrapper zero-pads both inputs, so padded rows/cols give 0.
    diff = p - t
    s_mse = jnp.sum(diff * diff)

    # --- Monotonicity partial: relu(p[:, j] - p[:, j+1]) for j in [0, L-2].
    # roll keeps whole vregs on the XLU instead of unaligned lane slices.
    p_next = pltpu.roll(p, shift=lp - 1, axis=1)     # p_next[:, j] == p[:, (j+1) % lp]
    mono = jnp.maximum(p - p_next, 0.0)
    s_mono = jnp.sum(jnp.where(lane < (actual_l - 1), mono, 0.0))

    # --- Unbiased-variance numerator, two-pass per row (rows fully resident).
    pm = jnp.where(col_valid, p, 0.0)
    row_mean = jnp.sum(pm, axis=1, keepdims=True) * (1.0 / actual_l)
    dev = jnp.where(col_valid, pm - row_mean, 0.0)
    s_dev2 = jnp.sum(dev * dev)

    # --- Emit partials as a lane-dense (8, 128) tile (unmasked vst writeback).
    out_lane = lax.broadcasted_iota(jnp.int32, (8, 128), 1)
    tile = jnp.where(out_lane == 0, s_mse,
           jnp.where(out_lane == 1, s_mono,
           jnp.where(out_lane == 2, s_dev2, 0.0)))
    out_ref[0] = tile


def _reference_loss(predictions, targets, lambda_mono=1.0, lambda_div=1.0):
    """Pure-JAX reference (and small-input fallback). Matches the PyTorch module."""
    p = predictions.astype(jnp.float32)
    t = targets.astype(jnp.float32)
    mse = jnp.mean((p - t) ** 2)
    mono = jnp.mean(jnp.maximum(p[:, :-1] - p[:, 1:], 0.0))
    var = jnp.var(p, axis=1, ddof=1)           # torch.var default: unbiased
    return mse + lambda_mono * mono - lambda_div * jnp.mean(var)


def depth_marker_loss(predictions, targets, lambda_mono=1.0, lambda_div=1.0,
                      *, force_kernel=False):
    """predictions, targets: (B, L) arrays. Returns scalar f32 loss."""
    B, L = predictions.shape
    if L < 2:
        raise ValueError("depth_marker_loss requires max_seq_len >= 2 "
                         "(L-1 appears in the mono term and unbiased variance).")

    # Tiny inputs: kernel launch + padded-vreg work dominates; let XLA fuse it.
    if not force_kernel and (B * L) < 8 * 128:
        return _reference_loss(predictions, targets, lambda_mono, lambda_div)

    # --- Tiling: lane-dense L, batch tile sized for a conservative VMEM budget
    # (2 inputs x 2 pipeline buffers x bm x Lp x 4B <= ~8 MiB, safe even under
    # v5e's 16 MiB scoped default and v7x's 64 MiB physical VMEM).
    Lp = max(128, _round_up(L, 128))
    bytes_per_row = Lp * 4 * 2 * 2                      # f32, 2 inputs, double buffer
    vmem_budget = 8 * 1024 * 1024
    bm_cap = max(8, (vmem_budget // bytes_per_row) // 8 * 8)
    bm = min(bm_cap, 512, _round_up(B, 8))
    Bp = _round_up(B, bm)
    nb = Bp // bm

    pred_p = jnp.pad(predictions, ((0, Bp - B), (0, Lp - L)))
    tgt_p = jnp.pad(targets, ((0, Bp - B), (0, Lp - L)))

    kernel = functools.partial(_depth_marker_loss_kernel, actual_l=L)
    partial_tiles = pl.pallas_call(
        kernel,
        out_shape=jax.ShapeDtypeStruct((nb, 8, 128), jnp.float32),
        grid=(nb,),
        in_specs=[
            pl.BlockSpec((bm, Lp), lambda i: (i, 0)),
            pl.BlockSpec((bm, Lp), lambda i: (i, 0)),
        ],
        out_specs=pl.BlockSpec((1, 8, 128), lambda i: (i, 0, 0)),
        compiler_params=pltpu.CompilerParams(
            dimension_semantics=("parallel",),      # per-block partials -> megacore-safe
            vmem_limit_bytes=32 * 1024 * 1024,
        ),
    )(pred_p, tgt_p)

    # Tiny final combine in the wrapper: sums over blocks + reciprocal
    # normalization + lambda weights, applied exactly once.
    partial = jnp.sum(partial_tiles[:, 0, :3], axis=0)   # [s_mse, s_mono, s_dev2]
    inv_bl = 1.0 / (B * L)
    inv_bl1 = 1.0 / (B * (L - 1))
    loss = (partial[0] * inv_bl
            + float(lambda_mono) * partial[1] * inv_bl1
            - float(lambda_div) * partial[2] * inv_bl1)
    return loss


if __name__ == "__main__":
    key = jax.random.PRNGKey(0)

    # Small shape from the module spec: (batch_size=2, max_seq_len=8).
    k1, k2 = jax.random.split(key)
    B, L = 2, 8
    predictions = jax.random.normal(k1, (B, L), dtype=jnp.float32)
    targets = jax.random.normal(k2, (B, L), dtype=jnp.float32)

    loss_small = depth_marker_loss(predictions, targets, 1.0, 1.0, force_kernel=True)
    loss_small = jax.block_until_ready(loss_small)
    ref_small = _reference_loss(predictions, targets, 1.0, 1.0)
    assert jnp.allclose(loss_small, ref_small, atol=1e-4, rtol=1e-4), (loss_small, ref_small)

    # Larger shape: exercises multi-block grid, row padding (1000 -> 1024) and
    # lane padding (200 -> 256).
    k3, k4 = jax.random.split(k2)
    B2, L2 = 1000, 200
    pred_big = 3.0 + 2.0 * jax.random.normal(k3, (B2, L2), dtype=jnp.float32)
    tgt_big = jax.random.normal(k4, (B2, L2), dtype=jnp.float32)

    loss_big = depth_marker_loss(pred_big, tgt_big, lambda_mono=0.5, lambda_div=0.25)
    loss_big = jax.block_until_ready(loss_big)
    ref_big = _reference_loss(pred_big, tgt_big, lambda_mono=0.5, lambda_div=0.25)
    assert jnp.allclose(loss_big, ref_big, atol=1e-4, rtol=1e-4), (loss_big, ref_big)

    print("KERNEL_OK")
</pallas_src>

<mosaic_0001>
module attributes {stable_mosaic.version = 11 : i64} {
  func.func @_depth_marker_loss_kernel(%arg0: i32, %arg1: memref<8x128xf32, #tpu.memory_space<vmem>>, %arg2: memref<8x128xf32, #tpu.memory_space<vmem>>, %arg3: memref<1x8x128xf32, #tpu.memory_space<vmem>>) attributes {dimension_semantics = [#tpu.dimension_semantics<parallel>], iteration_bounds = array<i64: 1>, scalar_prefetch = 0 : i64, scratch_operands = 0 : i64, tpu.core_type = #tpu.core_type<tc>, window_params = [{transform_indices = @transform_0, window_bounds = array<i64: 8, 128>}, {transform_indices = @transform_1, window_bounds = array<i64: 8, 128>}, {transform_indices = @transform_2, window_bounds = array<i64: 1, 8, 128>}]} {
    %c0 = arith.constant 0 : index
    %c0_0 = arith.constant 0 : index
    %0 = vector.load %arg1[%c0, %c0_0] : memref<8x128xf32, #tpu.memory_space<vmem>>, vector<8x128xf32>
    %c0_1 = arith.constant 0 : index
    %c0_2 = arith.constant 0 : index
    %1 = vector.load %arg2[%c0_1, %c0_2] : memref<8x128xf32, #tpu.memory_space<vmem>>, vector<8x128xf32>
    %2 = tpu.iota {dimensions = array<i32: 1>} : vector<8x128xi32>
    %c8_i32 = arith.constant 8 : i32
    %3 = vector.broadcast %c8_i32 : i32 to vector<8x128xi32>
    %4 = arith.cmpi slt, %2, %3 : vector<8x128xi32>
    %5 = arith.subf %0, %1 : vector<8x128xf32>
    %6 = arith.mulf %5, %5 : vector<8x128xf32>
    %7 = vector.shape_cast %6 : vector<8x128xf32> to vector<1x8x128xf32>
    %cst = arith.constant dense<0.000000e+00> : vector<1xf32>
    %8 = vector.multi_reduction <add>, %7, %cst [1, 2] : vector<1x8x128xf32> to vector<1xf32>
    %9 = vector.shape_cast %8 : vector<1xf32> to vector<1x1x1xf32>
    %10 = vector.extract %9[0, 0, 0] : f32 from vector<1x1x1xf32>
    %c127_i32 = arith.constant 127 : i32
    %11 = tpu.dynamic_rotate %0 by %c127_i32 dim 1 : vector<8x128xf32>, i32 -> vector<8x128xf32>
    %12 = arith.subf %0, %11 : vector<8x128xf32>
    %cst_3 = arith.constant 0.000000e+00 : f32
    %13 = vector.broadcast %cst_3 : f32 to vector<8x128xf32>
    %14 = arith.maximumf %12, %13 : vector<8x128xf32>
    %c7_i32 = arith.constant 7 : i32
    %15 = vector.broadcast %c7_i32 : i32 to vector<8x128xi32>
    %16 = arith.cmpi slt, %2, %15 : vector<8x128xi32>
    %cst_4 = arith.constant 0.000000e+00 : f32
    %17 = vector.broadcast %cst_4 : f32 to vector<8x128xf32>
    %18 = arith.select %16, %14, %17 : vector<8x128xi1>, vector<8x128xf32>
    %19 = vector.shape_cast %18 : vector<8x128xf32> to vector<1x8x128xf32>
    %cst_5 = arith.constant dense<0.000000e+00> : vector<1xf32>
    %20 = vector.multi_reduction <add>, %19, %cst_5 [1, 2] : vector<1x8x128xf32> to vector<1xf32>
    %21 = vector.shape_cast %20 : vector<1xf32> to vector<1x1x1xf32>
    %22 = vector.extract %21[0, 0, 0] : f32 from vector<1x1x1xf32>
    %cst_6 = arith.constant 0.000000e+00 : f32
    %23 = vector.broadcast %cst_6 : f32 to vector<8x128xf32>
    %24 = arith.select %4, %0, %23 : vector<8x128xi1>, vector<8x128xf32>
    %cst_7 = arith.constant dense<0.000000e+00> : vector<8xf32>
    %25 = vector.multi_reduction <add>, %24, %cst_7 [1] : vector<8x128xf32> to vector<8xf32>
    %26 = vector.shape_cast %25 : vector<8xf32> to vector<8x1xf32>
    %cst_8 = arith.constant 1.250000e-01 : f32
    %27 = vector.broadcast %cst_8 : f32 to vector<8x1xf32>
    %28 = arith.mulf %26, %27 : vector<8x1xf32>
    %29 = vector.broadcast %28 : vector<8x1xf32> to vector<8x128xf32>
    %30 = arith.subf %24, %29 : vector<8x128xf32>
    %cst_9 = arith.constant 0.000000e+00 : f32
    %31 = vector.broadcast %cst_9 : f32 to vector<8x128xf32>
    %32 = arith.select %4, %30, %31 : vector<8x128xi1>, vector<8x128xf32>
    %33 = arith.mulf %32, %32 : vector<8x128xf32>
    %34 = vector.shape_cast %33 : vector<8x128xf32> to vector<1x8x128xf32>
    %cst_10 = arith.constant dense<0.000000e+00> : vector<1xf32>
    %35 = vector.multi_reduction <add>, %34, %cst_10 [1, 2] : vector<1x8x128xf32> to vector<1xf32>
    %36 = vector.shape_cast %35 : vector<1xf32> to vector<1x1x1xf32>
    %37 = vector.extract %36[0, 0, 0] : f32 from vector<1x1x1xf32>
    %38 = tpu.iota {dimensions = array<i32: 1>} : vector<8x128xi32>
    %c0_i32 = arith.constant 0 : i32
    %39 = vector.broadcast %c0_i32 : i32 to vector<8x128xi32>
    %40 = arith.cmpi eq, %38, %39 : vector<8x128xi32>
    %c1_i32 = arith.constant 1 : i32
    %41 = vector.broadcast %c1_i32 : i32 to vector<8x128xi32>
    %42 = arith.cmpi eq, %38, %41 : vector<8x128xi32>
    %c2_i32 = arith.constant 2 : i32
    %43 = vector.broadcast %c2_i32 : i32 to vector<8x128xi32>
    %44 = arith.cmpi eq, %38, %43 : vector<8x128xi32>
    %cst_11 = arith.constant 0.000000e+00 : f32
    %45 = vector.broadcast %37 : f32 to vector<8x128xf32>
    %46 = vector.broadcast %cst_11 : f32 to vector<8x128xf32>
    %47 = arith.select %44, %45, %46 : vector<8x128xi1>, vector<8x128xf32>
    %48 = vector.broadcast %22 : f32 to vector<8x128xf32>
    %49 = arith.select %42, %48, %47 : vector<8x128xi1>, vector<8x128xf32>
    %50 = vector.broadcast %10 : f32 to vector<8x128xf32>
    %51 = arith.select %40, %50, %49 : vector<8x128xi1>, vector<8x128xf32>
    %c0_12 = arith.constant 0 : index
    %c0_13 = arith.constant 0 : index
    %c0_14 = arith.constant 0 : index
    %52 = vector.load %arg3[%c0_12, %c0_13, %c0_14] : memref<1x8x128xf32, #tpu.memory_space<vmem>>, vector<1x8x128xf32>
    %53 = vector.shape_cast %52 : vector<1x8x128xf32> to vector<8x128xf32>
    %54 = vector.shape_cast %51 : vector<8x128xf32> to vector<1x8x128xf32>
    tpu.vector_store %arg3[%c0_12, %c0_13, %c0_14], %54 {strides = array<i32>} : memref<1x8x128xf32, #tpu.memory_space<vmem>>, vector<1x8x128xf32>,
    return
  }
  func.func @transform_0(%arg0: i32) -> (i32, i32) {
    %c0_i32 = arith.constant 0 : i32
    %c0_i32_0 = arith.constant 0 : i32
    return %arg0, %c0_i32 : i32, i32
  }
  func.func @transform_1(%arg0: i32) -> (i32, i32) {
    %c0_i32 = arith.constant 0 : i32
    %c0_i32_0 = arith.constant 0 : i32
    return %arg0, %c0_i32 : i32, i32
  }
  func.func @transform_2(%arg0: i32) -> (i32, i32, i32) {
    %c0_i32 = arith.constant 0 : i32
    %c0_i32_0 = arith.constant 0 : i32
    %c0_i32_1 = arith.constant 0 : i32
    return %arg0, %c0_i32, %c0_i32_0 : i32, i32, i32
  }
}

</mosaic_0001>

<llo_original>
// kernel: tpu_custom_call.1
$region0: #{tpu_custom_call.1}
  #allocation0 [shape = 'u32[]', space=smem, size = 0x4, offset = 0x4, fixed_abs, tag = 'smem constant byte address 0x4 - core index']
  #allocation1 [shape = 'u32[144,128]{1,0:T(1,128)}', space=vmem, size = 0x12000, scoped, tag = 'internal scratch']
  %s0 = inlined_call_operand.hbm [shape: f32[8,128], index: 0, kind: input, shape index: {}]
  %s1 = inlined_call_operand.hbm [shape: f32[8,128], index: 1, kind: input, shape index: {}]
  %s2 = inlined_call_operand.hbm [shape: f32[1,8,128], index: 2, kind: output, shape index: {}]
  %s3 = sld [smem:[#allocation0]]
  $region26: #{tpu_custom_call.1} parent=0
    _
  %s5 = ssub.s32 1, %s3
  %s6 = scalar_select 0, %s5, %s3
  $region1: #{tpu_custom_call.1} parent=0
    #allocation2 [shape = 'u8[4096]{0}', space=vmem, size = 0x1000, scoped, tag = 'input window, operand 0, single buffered']
    #allocation3 [shape = 's32[1]{0}', space=sflag, size = 0x4, scoped, tag = 'scoped memory for tpu_custom_call.1']
    #allocation4 [shape = 's32[1]{0}', space=sflag, size = 0x4, scoped, tag = 'scoped memory for tpu_custom_call.1']
    #allocation5 [shape = 'u8[4096]{0}', space=vmem, size = 0x1000, scoped, tag = 'input window, operand 1, single buffered']
    #allocation6 [shape = 's32[1]{0}', space=sflag, size = 0x4, scoped, tag = 'scoped memory for tpu_custom_call.1']
    #allocation7 [shape = 'u8[4096]{0}', space=vmem, size = 0x1000, scoped, tag = 'output window, operand 0, single buffered']
    %7 = vsyncpa [#allocation3], 0
    %8 = vsyncpa [#allocation6], 0
    %9 = vsyncpa [#allocation4], 0
    // Predicated region
    $region2: #{tpu_custom_call.1} parent=1 // pred_check
      _
    $region3: #{tpu_custom_call.1} parent=1 // pred_check_branch
      %11 = sbr.rel (0) target = $region5
    $region4: #{tpu_custom_call.1} parent=1 // pred_region
      %s13 = ssub.s32 128, 128
      %14 = vsyncadd [#allocation3], %s13
      %s16 = sshll.u32 [#allocation2], 4
      %s17 = int_to_ptr.vmem [resolvable:$true] %s16
      %19 = dma.hbm_to_vmem [thread:$0]  %s0, 128, %s17, [#allocation3]
    $region5: #{tpu_custom_call.1} parent=1 // pred_fallthru
      _
    // Predicated region
    $region6: #{tpu_custom_call.1} parent=1 // pred_check
      _
    $region7: #{tpu_custom_call.1} parent=1 // pred_check_branch
      %21 = sbr.rel (0) target = $region9
    $region8: #{tpu_custom_call.1} parent=1 // pred_region
      %s23 = ssub.s32 128, 128
      %24 = vsyncadd [#allocation6], %s23
      %s26 = sshll.u32 [#allocation5], 4
      %s27 = int_to_ptr.vmem [resolvable:$true] %s26
      %29 = dma.hbm_to_vmem [thread:$0]  %s1, 128, %s27, [#allocation6]
    $region9: #{tpu_custom_call.1} parent=1 // pred_fallthru
      _
    // Predicated region
    $region10: #{tpu_custom_call.1} parent=1 // pred_check
      _
    $region11: #{tpu_custom_call.1} parent=1 // pred_check_branch
      %31 = sbr.rel (0) target = $region13
    $region12: #{tpu_custom_call.1} parent=1 // pred_region
      %32 = dma.done [#allocation3], 128
    $region13: #{tpu_custom_call.1} parent=1 // pred_fallthru
      _
    // Predicated region
    $region14: #{tpu_custom_call.1} parent=1 // pred_check
      _
    $region15: #{tpu_custom_call.1} parent=1 // pred_check_branch
      %34 = sbr.rel (0) target = $region17
    $region16: #{tpu_custom_call.1} parent=1 // pred_region
      %35 = dma.done [#allocation6], 128
    $region17: #{tpu_custom_call.1} parent=1 // pred_fallthru
      _
    %v36 = vld [vmem:[#allocation2] sm:$0xff]
    %v37 = vld [vmem:[#allocation5] sm:$0xff]
    %v38 = vlaneseq
    %v39 = vand.u32 %v38, 127
    %vm40 = vcmp.lt.s32.totalorder %v39, 8
    %v41 = vsub.f32 %v36, %v37
    %v42 = vmul.f32 %v41, %v41
    %43 = vadd.xlane.f32.xlu0 %v42
    %v44 = vpop.xlane.xlu0 %43
    %v45 = vrot.slane %v44, 4
    %v46 = vadd.f32 %v44, %v45
    %v47 = vrot.slane %v46, 2
    %v48 = vadd.f32 %v46, %v47
    %v49 = vrot.slane %v48, 1
    %v50 = vadd.f32 %v48, %v49
    %s51 = vtos %v50
    %52 = vrot.lane.b32.xlu0 %v36, 127
    %v53 = vpop.permute.xlu0 %52
    %v54 = vsub.f32 %v36, %v53
    %v55 = vmax.f32 %v54, 0.0
    %vm56 = vcmp.lt.s32.totalorder %v39, 7
    %v57 = vsel %vm56, %v55, 0.0
    %58 = vadd.xlane.f32.xlu0 %v57
    %v59 = vpop.xlane.xlu0 %58
    %v60 = vrot.slane %v59, 4
    %v61 = vadd.f32 %v59, %v60
    %v62 = vrot.slane %v61, 2
    %v63 = vadd.f32 %v61, %v62
    %v64 = vrot.slane %v63, 1
    %v65 = vadd.f32 %v63, %v64
    %s66 = vtos %v65
    %v67 = vsel %vm40, %v36, 0.0
    %68 = vadd.xlane.f32.xlu0 %v67
    %v69 = vpop.xlane.xlu0 %68
    %v70 = vmul.f32 %v69, 0.125
    %v71 = vsub.f32 %v67, %v70
    %v72 = vsel %vm40, %v71, 0.0
    %v73 = vmul.f32 %v72, %v72
    %74 = vadd.xlane.f32.xlu0 %v73
    %v75 = vpop.xlane.xlu0 %74
    %v76 = vrot.slane %v75, 4
    %v77 = vadd.f32 %v75, %v76
    %v78 = vrot.slane %v77, 2
    %v79 = vadd.f32 %v77, %v78
    %v80 = vrot.slane %v79, 1
    %v81 = vadd.f32 %v79, %v80
    %s82 = vtos %v81
    %vm83 = vcmp.eq.s32.totalorder %v39, 0
    %vm84 = vcmp.eq.s32.totalorder %v39, 1
    %vm85 = vcmp.eq.s32.totalorder %v39, 2
    %v86 = vstv %s82
    %v87 = vsel %vm85, %v86, 0.0
    %v88 = vstv %s66
    %v89 = vsel %vm84, %v88, %v87
    %v90 = vstv %s51
    %v91 = vsel %vm83, %v90, %v89
    %92 = vst [vmem:[#allocation7] sm:$0xff] %v91
    // Predicated region
    $region18: #{tpu_custom_call.1} parent=1 // pred_check
      _
    $region19: #{tpu_custom_call.1} parent=1 // pred_check_branch
      %94 = sbr.rel (0) target = $region21
    $region20: #{tpu_custom_call.1} parent=1 // pred_region
      %s96 = ssub.s32 128, 128
      %97 = vsyncadd [#allocation4], %s96
      %s99 = sshll.u32 [#allocation7], 4
      %s100 = int_to_ptr.vmem [resolvable:$true] %s99
      %102 = dma.vmem_to_hbm [thread:$0]  %s100, 128, %s2, [#allocation4]
    $region21: #{tpu_custom_call.1} parent=1 // pred_fallthru
      _
    // Predicated region
    $region22: #{tpu_custom_call.1} parent=1 // pred_check
      _
    $region23: #{tpu_custom_call.1} parent=1 // pred_check_branch
      %104 = sbr.rel (0) target = $region25
    $region24: #{tpu_custom_call.1} parent=1 // pred_region
      %105 = dma.done [#allocation4], 128
    $region25: #{tpu_custom_call.1} parent=1 // pred_fallthru
      _
    %106 = vsyncpa [#allocation3], 1
    %107 = vsyncpa [#allocation6], 1
    %108 = vsyncpa [#allocation4], 1

</llo_original>
